<compile_context>
chip_gen: v7x
topology: tpu7x:2x2x1
jax: 0.10.0
libtpu: 0.0.40
codegen_flags: <defaults>
</compile_context>

<pallas_src>
import functools
import math

import jax
import jax.numpy as jnp
from jax.experimental import pallas as pl
from jax.experimental.pallas import tpu as pltpu

_LANE = 128
_ROW_ALIGN = 16      # bf16 packs 16 rows/vreg; also satisfies f32's 8-row alignment
_MAX_BLOCK_M = 512   # 512-row tiles measured ~85% of HBM roofline vs ~29% at 128


def _round_up(x: int, m: int) -> int:
    return (x + m - 1) // m * m


# ----------------------------------------------------------------------------
# Fused kernel: one row-tile of x through every layer.
# refs layout: x_ref, (w0, b0), (w1, b1), ..., (wL-1, bL-1), o_ref
# ----------------------------------------------------------------------------
def _fused_mlp_kernel(*refs, n_layers: int, compute_dtype):
    x_ref = refs[0]
    o_ref = refs[1 + 2 * n_layers]

    h = x_ref[...].astype(compute_dtype)          # f32 -> bf16 in-kernel (VPU, free)
    for l in range(n_layers):                     # static unroll (few layers)
        w_ref = refs[1 + 2 * l]                   # (K_l, N_l) bf16, VMEM-resident
        b_ref = refs[2 + 2 * l]                   # (1,   N_l) bf16
        acc = jnp.dot(h, w_ref[...], preferred_element_type=jnp.float32)   # MXU, f32 acc
        acc = acc + b_ref[...].astype(jnp.float32)                         # one broadcast/layer
        if l < n_layers - 1:
            h = jnp.tanh(acc).astype(compute_dtype)    # EUP tanh, back to bf16 MXU path
        else:
            o_ref[...] = acc.astype(o_ref.dtype)       # lane-dense bf16 store


# ----------------------------------------------------------------------------
# Param init (matches nn.Linear default U(-1/sqrt(fan_in), 1/sqrt(fan_in)))
# ----------------------------------------------------------------------------
def init_mlp_params(key, sizes, dtype=jnp.float32):
    params = []
    for i in range(len(sizes) - 1):
        fan_in, fan_out = sizes[i], sizes[i + 1]
        key, kw, kb = jax.random.split(key, 3)
        bound = 1.0 / math.sqrt(fan_in)
        # Stored transposed: (in_features, out_features), so forward is x @ W + b.
        w_t = jax.random.uniform(kw, (fan_in, fan_out), dtype, -bound, bound)
        b = jax.random.uniform(kb, (fan_out,), dtype, -bound, bound)
        params.append((w_t, b))
    return params


def pack_mlp_params(params, compute_dtype=jnp.bfloat16):
    """Cast params to bf16; zero-pad ONLY the last layer's N to a lane multiple.

    Intermediate K/N dims keep their true sizes (weights are passed as
    full-array blocks, always legal), so weight HBM reads aren't inflated.
    Zero padding keeps the math exact (padded weight cols / bias entries are 0).
    """
    packed = []
    n_layers = len(params)
    for i, (w_t, b) in enumerate(params):
        k, n = w_t.shape
        n_pad = _round_up(n, _LANE) if i == n_layers - 1 else n
        w_p = jnp.zeros((k, n_pad), compute_dtype).at[:, :n].set(w_t.astype(compute_dtype))
        b_p = jnp.zeros((1, n_pad), compute_dtype).at[:, :n].set(b.astype(compute_dtype))
        packed.append((w_p, b_p))
    return packed


def _choose_block_m(M: int) -> int:
    bm = min(_MAX_BLOCK_M, _round_up(max(M, _ROW_ALIGN), _ROW_ALIGN))
    if M > _ROW_ALIGN:
        # v7x has 2 TensorCores per chip: guarantee >= 2 grid steps so the
        # "parallel" axis can shard rows across both (no-op on v5e/v6e).
        bm = min(bm, _round_up((M + 1) // 2, _ROW_ALIGN))
    return bm


# ----------------------------------------------------------------------------
# Wrapper: build specs, call the fused kernel, slice/upcast the real output.
# ----------------------------------------------------------------------------
def mlp_forward(packed_params, x, out_features):
    """x: (M, in_features) f32 -> (M, out_features) f32."""
    M, K = x.shape
    n_layers = len(packed_params)
    compute_dtype = packed_params[0][0].dtype
    assert K == packed_params[0][0].shape[0]
    NLp = packed_params[-1][0].shape[1]

    block_m = _choose_block_m(M)
    Mp = _round_up(M, block_m)
    # Only materialize a zero-padded copy of x when the batch is ragged.
    x_in = x if Mp == M else jnp.zeros((Mp, K), x.dtype).at[:M].set(x)

    # Input rows: f32, true feature width (block last dim == full array dim).
    in_specs = [pl.BlockSpec((block_m, K), lambda i: (i, 0))]
    operands = [x_in]
    for w_p, b_p in packed_params:
        kp, np_ = w_p.shape
        # Grid-invariant full-array blocks -> weights/biases stay VMEM-resident.
        in_specs.append(pl.BlockSpec((kp, np_), lambda i: (0, 0)))
        in_specs.append(pl.BlockSpec((1, np_), lambda i: (0, 0)))
        operands.append(w_p)
        operands.append(b_p)

    flops = 2 * Mp * sum(w.shape[0] * w.shape[1] for w, _ in packed_params)
    transcendentals = Mp * sum(w.shape[1] for w, _ in packed_params[:-1])
    bytes_accessed = (x_in.size * x_in.dtype.itemsize
                      + Mp * NLp * 2
                      + sum(w.size * 2 + b.size * 2 for w, b in packed_params))

    out_pad = pl.pallas_call(
        functools.partial(_fused_mlp_kernel, n_layers=n_layers,
                          compute_dtype=compute_dtype),
        out_shape=jax.ShapeDtypeStruct((Mp, NLp), compute_dtype),  # bf16 halves writeback
        grid=(Mp // block_m,),
        in_specs=in_specs,
        out_specs=pl.BlockSpec((block_m, NLp), lambda i: (i, 0)),
        compiler_params=pltpu.CompilerParams(
            dimension_semantics=("parallel",)),   # v7x: rows over both TCs
        cost_estimate=pl.CostEstimate(flops=flops,
                                      transcendentals=transcendentals,
                                      bytes_accessed=bytes_accessed),
    )(*operands)

    # TODO(synk): for MLPs whose resident weights approach VMEM (v7x: 64 MiB
    # physical / 32 MiB scoped default, v5e: 16 MiB scoped default), set
    # pltpu.CompilerParams(vmem_limit_bytes=...) from the weight footprint and
    # switch to a K-tiled, manually double-buffered weight pipeline.

    # Strip batch / lane padding and return f32 (matches the nn.Module output).
    return out_pad[:M, :out_features].astype(jnp.float32)


if __name__ == "__main__":
    sizes = (32, 64, 128, 16)   # MLP(sizes=(32, 64, 128, 16), bias=True, act=nn.Tanh)
    batch = 8

    key = jax.random.PRNGKey(0)
    key, kx = jax.random.split(key)
    x = jax.random.normal(kx, (batch, sizes[0]), jnp.float32)

    params = init_mlp_params(key, sizes)            # f32 "master" params
    packed = pack_mlp_params(params)                # bf16, final-N lane-padded

    out = mlp_forward(packed, x, out_features=sizes[-1])
    out = jax.block_until_ready(out)

    # Reference mirrors kernel numerics: bf16 params/activations, f32 accumulation,
    # bf16 rounding of intermediates between layers.
    ref = x.astype(jnp.bfloat16).astype(jnp.float32)
    for i, (w_t, b) in enumerate(params):
        wb = w_t.astype(jnp.bfloat16).astype(jnp.float32)
        bb = b.astype(jnp.bfloat16).astype(jnp.float32)
        ref = ref @ wb + bb
        if i < len(params) - 1:
            ref = jnp.tanh(ref).astype(jnp.bfloat16).astype(jnp.float32)

    assert out.shape == (batch, sizes[-1])
    max_err = jnp.max(jnp.abs(out - ref))
    assert jnp.allclose(out, ref, atol=2e-2, rtol=2e-2), f"max abs err {max_err}"

    print("KERNEL_OK")
</pallas_src>

<mosaic_0001>
module attributes {stable_mosaic.version = 11 : i64} {
  func.func @_fused_mlp_kernel(%arg0: i32, %arg1: memref<16x32xf32, #tpu.memory_space<vmem>>, %arg2: memref<32x64xbf16, #tpu.memory_space<vmem>>, %arg3: memref<1x64xbf16, #tpu.memory_space<vmem>>, %arg4: memref<64x128xbf16, #tpu.memory_space<vmem>>, %arg5: memref<1x128xbf16, #tpu.memory_space<vmem>>, %arg6: memref<128x128xbf16, #tpu.memory_space<vmem>>, %arg7: memref<1x128xbf16, #tpu.memory_space<vmem>>, %arg8: memref<16x128xbf16, #tpu.memory_space<vmem>>) attributes {dimension_semantics = [#tpu.dimension_semantics<parallel>], iteration_bounds = array<i64: 1>, scalar_prefetch = 0 : i64, scratch_operands = 0 : i64, tpu.core_type = #tpu.core_type<tc>, window_params = [{transform_indices = @transform_0, window_bounds = array<i64: 16, 32>}, {pipeline_mode = #tpu.pipeline_mode<synchronous>, transform_indices = @transform_1, window_bounds = array<i64: 32, 64>}, {pipeline_mode = #tpu.pipeline_mode<synchronous>, transform_indices = @transform_2, window_bounds = array<i64: 1, 64>}, {pipeline_mode = #tpu.pipeline_mode<synchronous>, transform_indices = @transform_3, window_bounds = array<i64: 64, 128>}, {pipeline_mode = #tpu.pipeline_mode<synchronous>, transform_indices = @transform_4, window_bounds = array<i64: 1, 128>}, {pipeline_mode = #tpu.pipeline_mode<synchronous>, transform_indices = @transform_5, window_bounds = array<i64: 128, 128>}, {pipeline_mode = #tpu.pipeline_mode<synchronous>, transform_indices = @transform_6, window_bounds = array<i64: 1, 128>}, {transform_indices = @transform_7, window_bounds = array<i64: 16, 128>}]} {
    %c0 = arith.constant 0 : index
    %c0_0 = arith.constant 0 : index
    %0 = vector.load %arg1[%c0, %c0_0] : memref<16x32xf32, #tpu.memory_space<vmem>>, vector<16x32xf32>
    %1 = arith.truncf %0 : vector<16x32xf32> to vector<16x32xbf16>
    %c0_1 = arith.constant 0 : index
    %c0_2 = arith.constant 0 : index
    %2 = vector.load %arg2[%c0_1, %c0_2] : memref<32x64xbf16, #tpu.memory_space<vmem>>, vector<32x64xbf16>
    %cst = arith.constant dense<0.000000e+00> : vector<16x64xf32>
    %3 = tpu.matmul %1, %2, %cst {dimension_numbers = #tpu.dot_dimension_numbers<[1], [0], [0], [1], [0, 0, 1, 1], [], []>} : vector<16x32xbf16>, vector<32x64xbf16>, vector<16x64xf32> -> vector<16x64xf32>
    %c0_3 = arith.constant 0 : index
    %c0_4 = arith.constant 0 : index
    %4 = vector.load %arg3[%c0_3, %c0_4] : memref<1x64xbf16, #tpu.memory_space<vmem>>, vector<1x64xbf16>
    %5 = arith.extf %4 : vector<1x64xbf16> to vector<1x64xf32>
    %6 = vector.broadcast %5 : vector<1x64xf32> to vector<16x64xf32>
    %7 = arith.addf %3, %6 : vector<16x64xf32>
    %8 = math.tanh %7 : vector<16x64xf32>
    %9 = arith.truncf %8 : vector<16x64xf32> to vector<16x64xbf16>
    %c0_5 = arith.constant 0 : index
    %c0_6 = arith.constant 0 : index
    %10 = vector.load %arg4[%c0_5, %c0_6] : memref<64x128xbf16, #tpu.memory_space<vmem>>, vector<64x128xbf16>
    %cst_7 = arith.constant dense<0.000000e+00> : vector<16x128xf32>
    %11 = tpu.matmul %9, %10, %cst_7 {dimension_numbers = #tpu.dot_dimension_numbers<[1], [0], [0], [1], [0, 0, 1, 1], [], []>} : vector<16x64xbf16>, vector<64x128xbf16>, vector<16x128xf32> -> vector<16x128xf32>
    %c0_8 = arith.constant 0 : index
    %c0_9 = arith.constant 0 : index
    %12 = vector.load %arg5[%c0_8, %c0_9] : memref<1x128xbf16, #tpu.memory_space<vmem>>, vector<1x128xbf16>
    %13 = arith.extf %12 : vector<1x128xbf16> to vector<1x128xf32>
    %14 = vector.broadcast %13 : vector<1x128xf32> to vector<16x128xf32>
    %15 = arith.addf %11, %14 : vector<16x128xf32>
    %16 = math.tanh %15 : vector<16x128xf32>
    %17 = arith.truncf %16 : vector<16x128xf32> to vector<16x128xbf16>
    %c0_10 = arith.constant 0 : index
    %c0_11 = arith.constant 0 : index
    %18 = vector.load %arg6[%c0_10, %c0_11] : memref<128x128xbf16, #tpu.memory_space<vmem>>, vector<128x128xbf16>
    %cst_12 = arith.constant dense<0.000000e+00> : vector<16x128xf32>
    %19 = tpu.matmul %17, %18, %cst_12 {dimension_numbers = #tpu.dot_dimension_numbers<[1], [0], [0], [1], [0, 0, 1, 1], [], []>} : vector<16x128xbf16>, vector<128x128xbf16>, vector<16x128xf32> -> vector<16x128xf32>
    %c0_13 = arith.constant 0 : index
    %c0_14 = arith.constant 0 : index
    %20 = vector.load %arg7[%c0_13, %c0_14] : memref<1x128xbf16, #tpu.memory_space<vmem>>, vector<1x128xbf16>
    %21 = arith.extf %20 : vector<1x128xbf16> to vector<1x128xf32>
    %22 = vector.broadcast %21 : vector<1x128xf32> to vector<16x128xf32>
    %23 = arith.addf %19, %22 : vector<16x128xf32>
    %24 = arith.truncf %23 : vector<16x128xf32> to vector<16x128xbf16>
    %c0_15 = arith.constant 0 : index
    %c0_16 = arith.constant 0 : index
    %25 = vector.load %arg8[%c0_15, %c0_16] : memref<16x128xbf16, #tpu.memory_space<vmem>>, vector<16x128xbf16>
    tpu.vector_store %arg8[%c0_15, %c0_16], %24 {strides = array<i32>} : memref<16x128xbf16, #tpu.memory_space<vmem>>, vector<16x128xbf16>,
    return
  }
  func.func @transform_0(%arg0: i32) -> (i32, i32) {
    %c0_i32 = arith.constant 0 : i32
    %c0_i32_0 = arith.constant 0 : i32
    return %arg0, %c0_i32 : i32, i32
  }
  func.func @transform_1(%arg0: i32) -> (i32, i32) {
    %c0_i32 = arith.constant 0 : i32
    %c0_i32_0 = arith.constant 0 : i32
    %c0_i32_1 = arith.constant 0 : i32
    return %c0_i32, %c0_i32_0 : i32, i32
  }
  func.func @transform_2(%arg0: i32) -> (i32, i32) {
    %c0_i32 = arith.constant 0 : i32
    %c0_i32_0 = arith.constant 0 : i32
    %c0_i32_1 = arith.constant 0 : i32
    return %c0_i32, %c0_i32_0 : i32, i32
  }
  func.func @transform_3(%arg0: i32) -> (i32, i32) {
    %c0_i32 = arith.constant 0 : i32
    %c0_i32_0 = arith.constant 0 : i32
    %c0_i32_1 = arith.constant 0 : i32
    return %c0_i32, %c0_i32_0 : i32, i32
  }
  func.func @transform_4(%arg0: i32) -> (i32, i32) {
    %c0_i32 = arith.constant 0 : i32
    %c0_i32_0 = arith.constant 0 : i32
    %c0_i32_1 = arith.constant 0 : i32
    return %c0_i32, %c0_i32_0 : i32, i32
  }
  func.func @transform_5(%arg0: i32) -> (i32, i32) {
    %c0_i32 = arith.constant 0 : i32
    %c0_i32_0 = arith.constant 0 : i32
    %c0_i32_1 = arith.constant 0 : i32
    return %c0_i32, %c0_i32_0 : i32, i32
  }
  func.func @transform_6(%arg0: i32) -> (i32, i32) {
    %c0_i32 = arith.constant 0 : i32
    %c0_i32_0 = arith.constant 0 : i32
    %c0_i32_1 = arith.constant 0 : i32
    return %c0_i32, %c0_i32_0 : i32, i32
  }
  func.func @transform_7(%arg0: i32) -> (i32, i32) {
    %c0_i32 = arith.constant 0 : i32
    %c0_i32_0 = arith.constant 0 : i32
    return %arg0, %c0_i32 : i32, i32
  }
}

</mosaic_0001>

<llo_original>
// kernel: tpu_custom_call.1
$region0: #{tpu_custom_call.1}
  #allocation0 [shape = 'u32[]', space=smem, size = 0x4, offset = 0x4, fixed_abs, tag = 'smem constant byte address 0x4 - core index']
  #allocation1 [shape = 'u32[144,128]{1,0:T(1,128)}', space=vmem, size = 0x12000, scoped, tag = 'internal scratch']
  %s0 = inlined_call_operand.hbm [shape: f32[16,32], index: 0, kind: input, shape index: {}]
  %s1 = inlined_call_operand.hbm [shape: bf16[32,64], index: 1, kind: input, shape index: {}]
  %s2 = inlined_call_operand.vmem [shape: bf16[1,64], index: 2, kind: input, shape index: {}]
  %s3 = inlined_call_operand.hbm [shape: bf16[64,128], index: 3, kind: input, shape index: {}]
  %s4 = inlined_call_operand.vmem [shape: bf16[1,128], index: 4, kind: input, shape index: {}]
  %s5 = inlined_call_operand.hbm [shape: bf16[128,128], index: 5, kind: input, shape index: {}]
  %s6 = inlined_call_operand.vmem [shape: bf16[1,128], index: 6, kind: input, shape index: {}]
  %s7 = inlined_call_operand.hbm [shape: bf16[16,128], index: 7, kind: output, shape index: {}]
  %s8 = sld [smem:[#allocation0]]
  $region54: #{tpu_custom_call.1} parent=0
    _
  %s10 = ssub.s32 1, %s8
  %s11 = scalar_select 0, %s10, %s8
  $region1: #{tpu_custom_call.1} parent=0
    #allocation2 [shape = 'u8[8192]{0}', space=vmem, size = 0x2000, scoped, tag = 'input window, operand 0, single buffered']
    #allocation3 [shape = 's32[1]{0}', space=sflag, size = 0x4, scoped, tag = 'scoped memory for tpu_custom_call.1']
    #allocation4 [shape = 's32[1]{0}', space=sflag, size = 0x4, scoped, tag = 'scoped memory for tpu_custom_call.1']
    #allocation5 [shape = 'u8[8192]{0}', space=vmem, size = 0x2000, scoped, tag = 'input window, operand 1, single buffered']
    #allocation6 [shape = 's32[1]{0}', space=sflag, size = 0x4, scoped, tag = 'scoped memory for tpu_custom_call.1']
    #allocation7 [shape = 'u8[16384]{0}', space=vmem, size = 0x4000, scoped, tag = 'input window, operand 3, single buffered']
    #allocation8 [shape = 'u8[32768]{0}', space=vmem, size = 0x8000, scoped, tag = 'input window, operand 5, single buffered']
    #allocation9 [shape = 's32[1]{0}', space=sflag, size = 0x4, scoped, tag = 'scoped memory for tpu_custom_call.1']
    #allocation10 [shape = 'u8[4096]{0}', space=vmem, size = 0x1000, scoped, tag = 'output window, operand 0, single buffered']
    %12 = vsyncpa [#allocation3], 0
    %13 = vsyncpa [#allocation6], 0
    %14 = vsyncpa [#allocation9], 0
    %15 = vsyncpa [#allocation4], 0
    // Predicated region
    $region2: #{tpu_custom_call.1} parent=1 // pred_check
      _
    $region3: #{tpu_custom_call.1} parent=1 // pred_check_branch
      %17 = sbr.rel (0) target = $region5
    $region4: #{tpu_custom_call.1} parent=1 // pred_region
      %s19 = ssub.s32 256, 256
      %20 = vsyncadd [#allocation3], %s19
      %s21 = sshll.u32 [#allocation2], 4
      %s22 = int_to_ptr.vmem [resolvable:$true] %s21
      %27 = dma.hbm_to_vmem [thread:$0]  %s0, 256, %s22, [#allocation3], 128, 128, 8
    $region5: #{tpu_custom_call.1} parent=1 // pred_fallthru
      _
    // Predicated region
    $region6: #{tpu_custom_call.1} parent=1 // pred_check
      _
    $region7: #{tpu_custom_call.1} parent=1 // pred_check_branch
      %29 = sbr.rel (0) target = $region9
    $region8: #{tpu_custom_call.1} parent=1 // pred_region
      %s31 = ssub.s32 256, 256
      %32 = vsyncadd [#allocation6], %s31
      %s33 = sshll.u32 [#allocation5], 4
      %s34 = int_to_ptr.vmem [resolvable:$true] %s33
      %39 = dma.hbm_to_vmem [thread:$0]  %s1, 256, %s34, [#allocation6], 64, 64, 4
    $region9: #{tpu_custom_call.1} parent=1 // pred_fallthru
      _
    // Predicated region
    $region10: #{tpu_custom_call.1} parent=1 // pred_check
      _
    $region11: #{tpu_custom_call.1} parent=1 // pred_check_branch
      %41 = sbr.rel (0) target = $region13
    $region12: #{tpu_custom_call.1} parent=1 // pred_region
      _
    $region13: #{tpu_custom_call.1} parent=1 // pred_fallthru
      _
    // Predicated region
    $region14: #{tpu_custom_call.1} parent=1 // pred_check
      _
    $region15: #{tpu_custom_call.1} parent=1 // pred_check_branch
      %43 = sbr.rel (0) target = $region17
    $region16: #{tpu_custom_call.1} parent=1 // pred_region
      %s45 = ssub.s32 512, 512
      %46 = vsyncadd [#allocation6], %s45
      %s47 = sshll.u32 [#allocation7], 4
      %s48 = int_to_ptr.vmem [resolvable:$true] %s47
      %53 = dma.hbm_to_vmem [thread:$0]  %s3, 512, %s48, [#allocation6], 64, 64, 4
    $region17: #{tpu_custom_call.1} parent=1 // pred_fallthru
      _
    // Predicated region
    $region18: #{tpu_custom_call.1} parent=1 // pred_check
      _
    $region19: #{tpu_custom_call.1} parent=1 // pred_check_branch
      %55 = sbr.rel (0) target = $region21
    $region20: #{tpu_custom_call.1} parent=1 // pred_region
      _
    $region21: #{tpu_custom_call.1} parent=1 // pred_fallthru
      _
    // Predicated region
    $region22: #{tpu_custom_call.1} parent=1 // pred_check
      _
    $region23: #{tpu_custom_call.1} parent=1 // pred_check_branch
      %57 = sbr.rel (0) target = $region25
    $region24: #{tpu_custom_call.1} parent=1 // pred_region
      %s59 = ssub.s32 1024, 1024
      %60 = vsyncadd [#allocation9], %s59
      %s61 = sshll.u32 [#allocation8], 4
      %s62 = int_to_ptr.vmem [resolvable:$true] %s61
      %67 = dma.hbm_to_vmem [thread:$0]  %s5, 1024, %s62, [#allocation9], 64, 64, 4
    $region25: #{tpu_custom_call.1} parent=1 // pred_fallthru
      _
    // Predicated region
    $region26: #{tpu_custom_call.1} parent=1 // pred_check
      _
    $region27: #{tpu_custom_call.1} parent=1 // pred_check_branch
      %69 = sbr.rel (0) target = $region29
    $region28: #{tpu_custom_call.1} parent=1 // pred_region
      _
    $region29: #{tpu_custom_call.1} parent=1 // pred_fallthru
      _
    // Predicated region
    $region30: #{tpu_custom_call.1} parent=1 // pred_check
      _
    $region31: #{tpu_custom_call.1} parent=1 // pred_check_branch
      %71 = sbr.rel (0) target = $region33
    $region32: #{tpu_custom_call.1} parent=1 // pred_region
      %72 = dma.done [#allocation3], 256
    $region33: #{tpu_custom_call.1} parent=1 // pred_fallthru
      _
    // Predicated region
    $region34: #{tpu_custom_call.1} parent=1 // pred_check
      _
    $region35: #{tpu_custom_call.1} parent=1 // pred_check_branch
      %74 = sbr.rel (0) target = $region37
    $region36: #{tpu_custom_call.1} parent=1 // pred_region
      %75 = dma.done [#allocation6], 256
    $region37: #{tpu_custom_call.1} parent=1 // pred_fallthru
      _
    // Predicated region
    $region38: #{tpu_custom_call.1} parent=1 // pred_check
      _
    $region39: #{tpu_custom_call.1} parent=1 // pred_check_branch
      %77 = sbr.rel (0) target = $region41
    $region40: #{tpu_custom_call.1} parent=1 // pred_region
      %78 = dma.done [#allocation6], 512
    $region41: #{tpu_custom_call.1} parent=1 // pred_fallthru
      _
    // Predicated region
    $region42: #{tpu_custom_call.1} parent=1 // pred_check
      _
    $region43: #{tpu_custom_call.1} parent=1 // pred_check_branch
      %80 = sbr.rel (0) target = $region45
    $region44: #{tpu_custom_call.1} parent=1 // pred_region
      %81 = dma.done [#allocation9], 1024
    $region45: #{tpu_custom_call.1} parent=1 // pred_fallthru
      _
    %v83 = vld [vmem:[#allocation2] sm:$0xff]
    %v84 = vld [vmem:[#allocation2 + $0x8] sm:$0xff]
    %v85 = vpack.c.bf16 %v84, %v83
    %v86 = vld [vmem:[#allocation5] sm:$0xf]
    %v87 = vld [vmem:[#allocation5 + $0x4] sm:$0xf]
    %v88 = vld [vmem:[#allocation5 + $0x8] sm:$0xf]
    %v89 = vld [vmem:[#allocation5 + $0xc] sm:$0xf]
    %v90 = vld [vmem:[%s2] sm:$0x1]
    %v91 = vunpack.c.l.bf16 %v90
    %v92 = vlaneseq
    %v93 = vshrl.u32 %v92, 7
    %v94 = vsub.s32 0, %v93
    %v95 = vrot.slane %v91, %v94
    %v100 = vunpack.c.l.b16 %v86
    %v101 = vunpack.c.l.b16 %v87
    %v102 = vunpack.c.l.b16 %v88
    %v103 = vunpack.c.l.b16 %v89
    %v104 = vpack.c.b16 %v101, %v100
    %v105 = vpack.c.b16 %v103, %v102
    %vm108 = vcmask 261120
    %v110 = vsel %vm108, %v85, 0
    %112 = vmatprep.subr.bf16.mxu0 0
    %113 = vmatpush1.bf16.msra.mxu0 %v104
    %114 = vmatprep.subr.bf16.mxu0 0
    %115 = vmatpush1.bf16.msra.mxu0 %v105
    %116 = vmatprep.subr.bf16.mxu0 0
    %117 = vmatpush1.bf16.msra.mxu0 0
    %118 = vmatprep.subr.bf16.mxu0 0
    %119 = vmatpush1.bf16.msra.mxu0 0
    %120 = vmatprep.subr.bf16.mxu0 0
    %121 = vmatpush1.bf16.msra.mxu0 0
    %122 = vmatprep.subr.bf16.mxu0 0
    %123 = vmatpush1.bf16.msra.mxu0 0
    %124 = vmatprep.subr.bf16.mxu0 0
    %125 = vmatpush1.bf16.msra.mxu0 0
    %126 = vmatprep.subr.bf16.mxu0 0
    %127 = vmatpush1.bf16.msra.mxu0 0
    %128 = vmatprep.subr.bf16.mxu0 0
    %129 = vmatpush1.bf16.msra.mxu0 0
    %130 = vmatprep.subr.bf16.mxu0 0
    %131 = vmatpush1.bf16.msra.mxu0 0
    %132 = vmatprep.subr.bf16.mxu0 0
    %133 = vmatpush1.bf16.msra.mxu0 0
    %134 = vmatprep.subr.bf16.mxu0 0
    %135 = vmatpush1.bf16.msra.mxu0 0
    %136 = vmatprep.subr.bf16.mxu0 0
    %137 = vmatpush1.bf16.msra.mxu0 0
    %138 = vmatprep.subr.bf16.mxu0 0
    %139 = vmatpush1.bf16.msra.mxu0 0
    %140 = vmatprep.subr.bf16.mxu0 0
    %141 = vmatpush1.bf16.msra.mxu0 0
    %142 = vmatprep.subr.bf16.mxu0 0
    %143 = vmatpush1.bf16.msra.mxu0 0
    %144 = vmatprep.mubr.bf16.mxu0 0
    %145 = vmatmul.mubr.bf16.gmra.mrb[0].mxu0 %v110
    %v146 = vpop.f32.mrb[0].mxu0
    %v147 = vadd.f32 %v95, %v146
    %v148 = vpop.f32.mrb[0].mxu0
    %v149 = vpop.f32.mrb[0].mxu0
    %v150 = vadd.f32 %v95, %v149
    %v151 = vpop.f32.mrb[0].mxu0
    %152 = vdwg.mxu0
    %v153 = vtanh.pop %v147
    %v154 = vtanh.pop %v150
    %v155 = vpack.c.bf16 %v154, %v153
    %v156 = vld [vmem:[#allocation7] sm:$0xf]
    %v157 = vld [vmem:[#allocation7 + $0x4] sm:$0xf]
    %v158 = vld [vmem:[#allocation7 + $0x8] sm:$0xf]
    %v159 = vld [vmem:[#allocation7 + $0xc] sm:$0xf]
    %v160 = vld [vmem:[#allocation7 + $0x10] sm:$0xf]
    %v161 = vld [vmem:[#allocation7 + $0x14] sm:$0xf]
    %v162 = vld [vmem:[#allocation7 + $0x18] sm:$0xf]
    %v163 = vld [vmem:[#allocation7 + $0x1c] sm:$0xf]
    %v164 = vld [vmem:[%s4] sm:$0x1]
    %v165 = vunpack.c.l.bf16 %v164
    %v166 = vlaneseq
    %v167 = vshrl.u32 %v166, 7
    %v168 = vsub.s32 0, %v167
    %v169 = vrot.slane %v165, %v168
    %v178 = vunpack.c.l.b16 %v156
    %v179 = vunpack.c.l.b16 %v157
    %v180 = vunpack.c.l.b16 %v158
    %v181 = vunpack.c.l.b16 %v159
    %v182 = vunpack.c.l.b16 %v160
    %v183 = vunpack.c.l.b16 %v161
    %v184 = vunpack.c.l.b16 %v162
    %v185 = vunpack.c.l.b16 %v163
    %v186 = vpack.c.b16 %v179, %v178
    %v187 = vpack.c.b16 %v181, %v180
    %v188 = vpack.c.b16 %v183, %v182
    %v189 = vpack.c.b16 %v185, %v184
    %vm194 = vcmask 523264
    %v196 = vsel %vm194, %v155, 0
    %198 = vmatprep.subr.bf16.mxu0 0
    %199 = vmatpush1.bf16.msra.mxu0 %v186
    %200 = vmatprep.subr.bf16.mxu0 0
    %201 = vmatpush1.bf16.msra.mxu0 %v187
    %202 = vmatprep.subr.bf16.mxu0 0
    %203 = vmatpush1.bf16.msra.mxu0 %v188
    %204 = vmatprep.subr.bf16.mxu0 0
    %205 = vmatpush1.bf16.msra.mxu0 %v189
    %206 = vmatprep.subr.bf16.mxu0 0
    %207 = vmatpush1.bf16.msra.mxu0 0
    %208 = vmatprep.subr.bf16.mxu0 0
    %209 = vmatpush1.bf16.msra.mxu0 0
    %210 = vmatprep.subr.bf16.mxu0 0
    %211 = vmatpush1.bf16.msra.mxu0 0
    %212 = vmatprep.subr.bf16.mxu0 0
    %213 = vmatpush1.bf16.msra.mxu0 0
    %214 = vmatprep.subr.bf16.mxu0 0
    %215 = vmatpush1.bf16.msra.mxu0 0
    %216 = vmatprep.subr.bf16.mxu0 0
    %217 = vmatpush1.bf16.msra.mxu0 0
    %218 = vmatprep.subr.bf16.mxu0 0
    %219 = vmatpush1.bf16.msra.mxu0 0
    %220 = vmatprep.subr.bf16.mxu0 0
    %221 = vmatpush1.bf16.msra.mxu0 0
    %222 = vmatprep.subr.bf16.mxu0 0
    %223 = vmatpush1.bf16.msra.mxu0 0
    %224 = vmatprep.subr.bf16.mxu0 0
    %225 = vmatpush1.bf16.msra.mxu0 0
    %226 = vmatprep.subr.bf16.mxu0 0
    %227 = vmatpush1.bf16.msra.mxu0 0
    %228 = vmatprep.subr.bf16.mxu0 0
    %229 = vmatpush1.bf16.msra.mxu0 0
    %230 = vmatprep.mubr.bf16.mxu0 0
    %231 = vmatmul.mubr.bf16.gmra.mrb[0].mxu0 %v196
    %v232 = vpop.f32.mrb[0].mxu0
    %v233 = vadd.f32 %v169, %v232
    %v234 = vpop.f32.mrb[0].mxu0
    %v235 = vpop.f32.mrb[0].mxu0
    %v236 = vadd.f32 %v169, %v235
    %v237 = vpop.f32.mrb[0].mxu0
    %238 = vdwg.mxu0
    %v239 = vtanh.pop %v233
    %v240 = vtanh.pop %v236
    %v241 = vpack.c.bf16 %v240, %v239
    %v242 = vld [vmem:[#allocation8] sm:$0xf]
    %v243 = vld [vmem:[#allocation8 + $0x4] sm:$0xf]
    %v244 = vld [vmem:[#allocation8 + $0x8] sm:$0xf]
    %v245 = vld [vmem:[#allocation8 + $0xc] sm:$0xf]
    %v246 = vld [vmem:[#allocation8 + $0x10] sm:$0xf]
    %v247 = vld [vmem:[#allocation8 + $0x14] sm:$0xf]
    %v248 = vld [vmem:[#allocation8 + $0x18] sm:$0xf]
    %v249 = vld [vmem:[#allocation8 + $0x1c] sm:$0xf]
    %v250 = vld [vmem:[#allocation8 + $0x20] sm:$0xf]
    %v251 = vld [vmem:[#allocation8 + $0x24] sm:$0xf]
    %v252 = vld [vmem:[#allocation8 + $0x28] sm:$0xf]
    %v253 = vld [vmem:[#allocation8 + $0x2c] sm:$0xf]
    %v254 = vld [vmem:[#allocation8 + $0x30] sm:$0xf]
    %v255 = vld [vmem:[#allocation8 + $0x34] sm:$0xf]
    %v256 = vld [vmem:[#allocation8 + $0x38] sm:$0xf]
    %v257 = vld [vmem:[#allocation8 + $0x3c] sm:$0xf]
    %v258 = vld [vmem:[%s6] sm:$0x1]
    %v259 = vunpack.c.l.bf16 %v258
    %v260 = vlaneseq
    %v261 = vshrl.u32 %v260, 7
    %v262 = vsub.s32 0, %v261
    %v263 = vrot.slane %v259, %v262
    %v280 = vunpack.c.l.b16 %v242
    %v281 = vunpack.c.l.b16 %v243
    %v282 = vunpack.c.l.b16 %v244
    %v283 = vunpack.c.l.b16 %v245
    %v284 = vunpack.c.l.b16 %v246
    %v285 = vunpack.c.l.b16 %v247
    %v286 = vunpack.c.l.b16 %v248
    %v287 = vunpack.c.l.b16 %v249
    %v288 = vunpack.c.l.b16 %v250
    %v289 = vunpack.c.l.b16 %v251
    %v290 = vunpack.c.l.b16 %v252
    %v291 = vunpack.c.l.b16 %v253
    %v292 = vunpack.c.l.b16 %v254
    %v293 = vunpack.c.l.b16 %v255
    %v294 = vunpack.c.l.b16 %v256
    %v295 = vunpack.c.l.b16 %v257
    %v296 = vpack.c.b16 %v281, %v280
    %v297 = vpack.c.b16 %v283, %v282
    %v298 = vpack.c.b16 %v285, %v284
    %v299 = vpack.c.b16 %v287, %v286
    %v300 = vpack.c.b16 %v289, %v288
    %v301 = vpack.c.b16 %v291, %v290
    %v302 = vpack.c.b16 %v293, %v292
    %v303 = vpack.c.b16 %v295, %v294
    %312 = vmatprep.subr.bf16.mxu0 0
    %313 = vmatpush1.bf16.msra.mxu0 %v296
    %314 = vmatprep.subr.bf16.mxu0 0
    %315 = vmatpush1.bf16.msra.mxu0 %v297
    %316 = vmatprep.subr.bf16.mxu0 0
    %317 = vmatpush1.bf16.msra.mxu0 %v298
    %318 = vmatprep.subr.bf16.mxu0 0
    %319 = vmatpush1.bf16.msra.mxu0 %v299
    %320 = vmatprep.subr.bf16.mxu0 0
    %321 = vmatpush1.bf16.msra.mxu0 %v300
    %322 = vmatprep.subr.bf16.mxu0 0
    %323 = vmatpush1.bf16.msra.mxu0 %v301
    %324 = vmatprep.subr.bf16.mxu0 0
    %325 = vmatpush1.bf16.msra.mxu0 %v302
    %326 = vmatprep.subr.bf16.mxu0 0
    %327 = vmatpush1.bf16.msra.mxu0 %v303
    %328 = vmatprep.subr.bf16.mxu0 0
    %329 = vmatpush1.bf16.msra.mxu0 0
    %330 = vmatprep.subr.bf16.mxu0 0
    %331 = vmatpush1.bf16.msra.mxu0 0
    %332 = vmatprep.subr.bf16.mxu0 0
    %333 = vmatpush1.bf16.msra.mxu0 0
    %334 = vmatprep.subr.bf16.mxu0 0
    %335 = vmatpush1.bf16.msra.mxu0 0
    %336 = vmatprep.subr.bf16.mxu0 0
    %337 = vmatpush1.bf16.msra.mxu0 0
    %338 = vmatprep.subr.bf16.mxu0 0
    %339 = vmatpush1.bf16.msra.mxu0 0
    %340 = vmatprep.subr.bf16.mxu0 0
    %341 = vmatpush1.bf16.msra.mxu0 0
    %342 = vmatprep.subr.bf16.mxu0 0
    %343 = vmatpush1.bf16.msra.mxu0 0
    %344 = vmatprep.mubr.bf16.mxu0 0
    %345 = vmatmul.mubr.bf16.gmra.mrb[0].mxu0 %v241
    %v346 = vpop.f32.mrb[0].mxu0
    %v347 = vadd.f32 %v263, %v346
    %v348 = vpop.f32.mrb[0].mxu0
    %v349 = vpop.f32.mrb[0].mxu0
    %v350 = vadd.f32 %v263, %v349
    %v351 = vpop.f32.mrb[0].mxu0
    %352 = vdwg.mxu0
    %v353 = vpack.c.bf16 %v350, %v347
    %v355 = vunpack.c.l.b16 %v353
    %v356 = vunpack.c.h.b16 %v353
    %v357 = vpack.c.b16 %v355, %v355
    %v358 = vpack.c.b16 %v356, %v356
    %361 = vst [vmem:[#allocation10] sm:$0xf] %v357
    %362 = vst [vmem:[#allocation10 + $0x4] sm:$0xf] %v358
    // Predicated region
    $region46: #{tpu_custom_call.1} parent=1 // pred_check
      _
    $region47: #{tpu_custom_call.1} parent=1 // pred_check_branch
      %364 = sbr.rel (0) target = $region49
    $region48: #{tpu_custom_call.1} parent=1 // pred_region
      %s366 = ssub.s32 128, 128
      %367 = vsyncadd [#allocation4], %s366
      %s368 = sshll.u32 [#allocation10], 4
      %s369 = int_to_ptr.vmem [resolvable:$true] %s368
      %374 = dma.vmem_to_hbm [thread:$0]  %s369, 128, %s7, [#allocation4], 64, 64, 4
    $region49: #{tpu_custom_call.1} parent=1 // pred_fallthru
      _
    // Predicated region
    $region50: #{tpu_custom_call.1} parent=1 // pred_check
      _
    $region51: #{tpu_custom_call.1} parent=1 // pred_check_branch
      %376 = sbr.rel (0) target = $region53
    $region52: #{tpu_custom_call.1} parent=1 // pred_region
      %377 = dma.done [#allocation4], 128
    $region53: #{tpu_custom_call.1} parent=1 // pred_fallthru
      _
    %378 = vsyncpa [#allocation3], 1
    %379 = vsyncpa [#allocation6], 1
    %380 = vsyncpa [#allocation9], 1
    %381 = vsyncpa [#allocation4], 1

</llo_original>
